<compile_context>
chip_gen: v7x
topology: tpu7x:2x2x1
jax: 0.10.0
libtpu: 0.0.40
codegen_flags: <defaults>
</compile_context>

<pallas_src>
import jax
import jax.numpy as jnp
from jax import lax
from jax.experimental import pallas as pl
from jax.experimental.pallas import tpu as pltpu

D_IN = 512
D_OUT = 512
EPS = 1e-5


def sim_projector_kernel(x_ref, w_ref, gb_ref, o_ref):
    # x_ref:  (N, D_IN)     full batch, full input features
    # w_ref:  (D_IN, TN)    (transposed) weight tile, TN = D_OUT by default
    # gb_ref: (2, TN)       row 0 = gamma, row 1 = beta
    # o_ref:  (N, TN)       output tile
    x = x_ref[...]
    w = w_ref[...]

    # Linear (bias omitted: it cancels exactly under training-mode BatchNorm).
    y = jnp.dot(x, w, preferred_element_type=jnp.float32)

    # BatchNorm1d (training mode): per-feature stats over the batch dim.
    n = y.shape[0]
    mean = jnp.sum(y, axis=0, keepdims=True) * (1.0 / n)      # (1, TN) XLU
    diff = y - mean
    var = jnp.sum(diff * diff, axis=0, keepdims=True) * (1.0 / n)  # biased var
    inv_std = lax.rsqrt(var + EPS)                             # (1, TN) EUP

    # Fold affine: one full-size multiply + one add on the (N, TN) tile.
    gamma = gb_ref[0:1, :]
    beta = gb_ref[1:2, :]
    scale = gamma * inv_std                                    # (1, TN)
    o_ref[...] = (diff * scale + beta).astype(o_ref.dtype)


def sim_projector_forward(x, w_t, gamma, beta, *, tn=None):
    """x: [N, 512] float32. w_t: [512, 512] stored (in, out). Returns [N, 512].

    tn=None -> single grid step (default, best at these shapes).
    tn=256  -> grid=(2,) "parallel": useful to engage both v7x TensorCores.
    """
    n, d_in = x.shape
    d_out = w_t.shape[1]
    assert d_in == D_IN and d_out == D_OUT
    if tn is None:
        tn = d_out
    assert d_out % tn == 0

    # Pack per-feature BN params into one array -> one DMA.
    gb = jnp.stack([gamma, beta], axis=0)  # (2, D_OUT)

    grid = (d_out // tn,)
    return pl.pallas_call(
        sim_projector_kernel,
        out_shape=jax.ShapeDtypeStruct((n, d_out), x.dtype),
        grid_spec=pltpu.PrefetchScalarGridSpec(
            num_scalar_prefetch=0,
            grid=grid,
            in_specs=[
                pl.BlockSpec((n, d_in), lambda j: (0, 0)),    # x (full batch)
                pl.BlockSpec((d_in, tn), lambda j: (0, j)),   # W tile
                pl.BlockSpec((2, tn), lambda j: (0, j)),      # gamma/beta tile
            ],
            out_specs=pl.BlockSpec((n, tn), lambda j: (0, j)),
        ),
        compiler_params=pltpu.CompilerParams(
            dimension_semantics=("parallel",)
        ),
    )(x, w_t, gb)


def reference_forward(x, w_t, b, gamma, beta):
    # Reference keeps the linear bias (original module semantics); it cancels
    # under training-mode BN, so the bias-free kernel matches up to rounding.
    y = x @ w_t + b
    mean = jnp.mean(y, axis=0, keepdims=True)
    var = jnp.mean((y - mean) ** 2, axis=0, keepdims=True)
    return gamma * (y - mean) / jnp.sqrt(var + EPS) + beta


if __name__ == "__main__":
    key = jax.random.PRNGKey(0)
    k_x, k_w, k_b, k_g, k_be = jax.random.split(key, 5)

    N = 8  # small batch (>1 required for training-mode batchnorm stats)

    # Input batch of 512-dim "image" embeddings.
    x = jax.random.normal(k_x, (N, D_IN), dtype=jnp.float32)

    # PyTorch-style uniform init for Linear; non-trivial BN affine params to
    # exercise the packed gamma/beta path.
    bound = 1.0 / (D_IN ** 0.5)
    w = jax.random.uniform(k_w, (D_OUT, D_IN), jnp.float32, -bound, bound)
    b = jax.random.uniform(k_b, (D_OUT,), jnp.float32, -bound, bound)
    w_t = w.T  # store as (in, out) for x @ w_t
    gamma = 1.0 + 0.1 * jax.random.normal(k_g, (D_OUT,), jnp.float32)
    beta = 0.1 * jax.random.normal(k_be, (D_OUT,), jnp.float32)

    out = sim_projector_forward(x, w_t, gamma, beta)
    out = jax.block_until_ready(out)

    ref = reference_forward(x, w_t, b, gamma, beta)
    assert out.shape == (N, D_OUT)
    assert jnp.allclose(out, ref, atol=1e-4, rtol=1e-4), "mismatch vs reference"

    print("KERNEL_OK")
</pallas_src>

<mosaic_0001>
module attributes {stable_mosaic.version = 11 : i64} {
  func.func @sim_projector_kernel(%arg0: i32, %arg1: memref<8x512xf32, #tpu.memory_space<vmem>>, %arg2: memref<512x512xf32, #tpu.memory_space<vmem>>, %arg3: memref<2x512xf32, #tpu.memory_space<vmem>>, %arg4: memref<8x512xf32, #tpu.memory_space<vmem>>) attributes {dimension_semantics = [#tpu.dimension_semantics<parallel>], iteration_bounds = array<i64: 1>, scalar_prefetch = 0 : i64, scratch_operands = 0 : i64, tpu.core_type = #tpu.core_type<tc>, window_params = [{pipeline_mode = #tpu.pipeline_mode<synchronous>, transform_indices = @transform_0, window_bounds = array<i64: 8, 512>}, {transform_indices = @transform_1, window_bounds = array<i64: 512, 512>}, {transform_indices = @transform_2, window_bounds = array<i64: 2, 512>}, {transform_indices = @transform_3, window_bounds = array<i64: 8, 512>}]} {
    %c0 = arith.constant 0 : index
    %c0_0 = arith.constant 0 : index
    %0 = vector.load %arg1[%c0, %c0_0] : memref<8x512xf32, #tpu.memory_space<vmem>>, vector<8x512xf32>
    %c0_1 = arith.constant 0 : index
    %c0_2 = arith.constant 0 : index
    %1 = vector.load %arg2[%c0_1, %c0_2] : memref<512x512xf32, #tpu.memory_space<vmem>>, vector<512x512xf32>
    %cst = arith.constant dense<0.000000e+00> : vector<8x512xf32>
    %2 = tpu.matmul %0, %1, %cst {dimension_numbers = #tpu.dot_dimension_numbers<[1], [0], [0], [1], [0, 0, 1, 1], [], []>} : vector<8x512xf32>, vector<512x512xf32>, vector<8x512xf32> -> vector<8x512xf32>
    %cst_3 = arith.constant dense<0.000000e+00> : vector<512xf32>
    %3 = vector.multi_reduction <add>, %2, %cst_3 [0] : vector<8x512xf32> to vector<512xf32>
    %4 = vector.shape_cast %3 : vector<512xf32> to vector<1x512xf32>
    %cst_4 = arith.constant 1.250000e-01 : f32
    %5 = vector.broadcast %cst_4 : f32 to vector<1x512xf32>
    %6 = arith.mulf %4, %5 : vector<1x512xf32>
    %7 = vector.broadcast %6 : vector<1x512xf32> to vector<8x512xf32>
    %8 = arith.subf %2, %7 : vector<8x512xf32>
    %9 = arith.mulf %8, %8 : vector<8x512xf32>
    %cst_5 = arith.constant dense<0.000000e+00> : vector<512xf32>
    %10 = vector.multi_reduction <add>, %9, %cst_5 [0] : vector<8x512xf32> to vector<512xf32>
    %11 = vector.shape_cast %10 : vector<512xf32> to vector<1x512xf32>
    %cst_6 = arith.constant 1.250000e-01 : f32
    %12 = vector.broadcast %cst_6 : f32 to vector<1x512xf32>
    %13 = arith.mulf %11, %12 : vector<1x512xf32>
    %cst_7 = arith.constant 9.99999974E-6 : f32
    %14 = vector.broadcast %cst_7 : f32 to vector<1x512xf32>
    %15 = arith.addf %13, %14 : vector<1x512xf32>
    %16 = math.rsqrt %15 : vector<1x512xf32>
    %c0_8 = arith.constant 0 : index
    %c0_9 = arith.constant 0 : index
    %17 = vector.load %arg3[%c0_8, %c0_9] : memref<2x512xf32, #tpu.memory_space<vmem>>, vector<1x512xf32>
    %c1 = arith.constant 1 : index
    %c0_10 = arith.constant 0 : index
    %18 = vector.load %arg3[%c1, %c0_10] : memref<2x512xf32, #tpu.memory_space<vmem>>, vector<1x512xf32>
    %19 = arith.mulf %17, %16 : vector<1x512xf32>
    %20 = vector.broadcast %19 : vector<1x512xf32> to vector<8x512xf32>
    %21 = arith.mulf %8, %20 : vector<8x512xf32>
    %22 = vector.broadcast %18 : vector<1x512xf32> to vector<8x512xf32>
    %23 = arith.addf %21, %22 : vector<8x512xf32>
    %c0_11 = arith.constant 0 : index
    %c0_12 = arith.constant 0 : index
    %24 = vector.load %arg4[%c0_11, %c0_12] : memref<8x512xf32, #tpu.memory_space<vmem>>, vector<8x512xf32>
    tpu.vector_store %arg4[%c0_11, %c0_12], %23 {strides = array<i32>} : memref<8x512xf32, #tpu.memory_space<vmem>>, vector<8x512xf32>,
    return
  }
  func.func @transform_0(%arg0: i32) -> (i32, i32) {
    %c0_i32 = arith.constant 0 : i32
    %c0_i32_0 = arith.constant 0 : i32
    %c0_i32_1 = arith.constant 0 : i32
    return %c0_i32, %c0_i32_0 : i32, i32
  }
  func.func @transform_1(%arg0: i32) -> (i32, i32) {
    %c0_i32 = arith.constant 0 : i32
    %c0_i32_0 = arith.constant 0 : i32
    return %c0_i32, %arg0 : i32, i32
  }
  func.func @transform_2(%arg0: i32) -> (i32, i32) {
    %c0_i32 = arith.constant 0 : i32
    %c0_i32_0 = arith.constant 0 : i32
    return %c0_i32, %arg0 : i32, i32
  }
  func.func @transform_3(%arg0: i32) -> (i32, i32) {
    %c0_i32 = arith.constant 0 : i32
    %c0_i32_0 = arith.constant 0 : i32
    return %c0_i32, %arg0 : i32, i32
  }
}

</mosaic_0001>

<llo_original>
// kernel: tpu_custom_call.1
$region0: #{tpu_custom_call.1}
  #allocation0 [shape = 'u32[]', space=smem, size = 0x4, offset = 0x4, fixed_abs, tag = 'smem constant byte address 0x4 - core index']
  #allocation1 [shape = 'u32[144,128]{1,0:T(1,128)}', space=vmem, size = 0x12000, scoped, tag = 'internal scratch']
  %s0 = inlined_call_operand.hbm [shape: f32[8,512], index: 0, kind: input, shape index: {}]
  %s1 = inlined_call_operand.hbm [shape: f32[512,512], index: 1, kind: input, shape index: {}]
  %s2 = inlined_call_operand.hbm [shape: f32[2,512], index: 2, kind: input, shape index: {}]
  %s3 = inlined_call_operand.hbm [shape: f32[8,512], index: 3, kind: output, shape index: {}]
  %s4 = sld [smem:[#allocation0]]
  $region34: #{tpu_custom_call.1} parent=0
    _
  %s6 = ssub.s32 1, %s4
  %s7 = scalar_select 0, %s6, %s4
  $region1: #{tpu_custom_call.1} parent=0
    #allocation2 [shape = 'u8[16384]{0}', space=vmem, size = 0x4000, scoped, tag = 'input window, operand 0, single buffered']
    #allocation3 [shape = 's32[1]{0}', space=sflag, size = 0x4, scoped, tag = 'scoped memory for tpu_custom_call.1']
    #allocation4 [shape = 's32[1]{0}', space=sflag, size = 0x4, scoped, tag = 'scoped memory for tpu_custom_call.1']
    #allocation5 [shape = 'u8[1048576]{0}', space=vmem, size = 0x100000, scoped, tag = 'input window, operand 1, single buffered']
    #allocation6 [shape = 's32[1]{0}', space=sflag, size = 0x4, scoped, tag = 'scoped memory for tpu_custom_call.1']
    #allocation7 [shape = 'u8[4096]{0}', space=vmem, size = 0x1000, scoped, tag = 'input window, operand 2, single buffered']
    #allocation8 [shape = 'u8[16384]{0}', space=vmem, size = 0x4000, scoped, tag = 'output window, operand 0, single buffered']
    %8 = vsyncpa [#allocation3], 0
    %9 = vsyncpa [#allocation6], 0
    %10 = vsyncpa [#allocation4], 0
    // Predicated region
    $region2: #{tpu_custom_call.1} parent=1 // pred_check
      _
    $region3: #{tpu_custom_call.1} parent=1 // pred_check_branch
      %12 = sbr.rel (0) target = $region5
    $region4: #{tpu_custom_call.1} parent=1 // pred_region
      %s14 = ssub.s32 512, 512
      %15 = vsyncadd [#allocation3], %s14
      %s17 = sshll.u32 [#allocation2], 4
      %s18 = int_to_ptr.vmem [resolvable:$true] %s17
      %20 = dma.hbm_to_vmem [thread:$0]  %s0, 512, %s18, [#allocation3]
    $region5: #{tpu_custom_call.1} parent=1 // pred_fallthru
      _
    // Predicated region
    $region6: #{tpu_custom_call.1} parent=1 // pred_check
      _
    $region7: #{tpu_custom_call.1} parent=1 // pred_check_branch
      %22 = sbr.rel (0) target = $region9
    $region8: #{tpu_custom_call.1} parent=1 // pred_region
      %s24 = ssub.s32 32768, 32768
      %25 = vsyncadd [#allocation6], %s24
      %s26 = sshll.u32 [#allocation5], 4
      %s27 = int_to_ptr.vmem [resolvable:$true] %s26
      %32 = dma.hbm_to_vmem [thread:$0]  %s1, 32768, %s27, [#allocation6], 512, 512, 32
    $region9: #{tpu_custom_call.1} parent=1 // pred_fallthru
      _
    // Predicated region
    $region10: #{tpu_custom_call.1} parent=1 // pred_check
      _
    $region11: #{tpu_custom_call.1} parent=1 // pred_check_branch
      %34 = sbr.rel (0) target = $region13
    $region12: #{tpu_custom_call.1} parent=1 // pred_region
      %s36 = ssub.s32 128, 128
      %37 = vsyncadd [#allocation6], %s36
      %s39 = sshll.u32 [#allocation7], 4
      %s40 = int_to_ptr.vmem [resolvable:$true] %s39
      %42 = dma.hbm_to_vmem [thread:$0]  %s2, 128, %s40, [#allocation6]
    $region13: #{tpu_custom_call.1} parent=1 // pred_fallthru
      _
    // Predicated region
    $region14: #{tpu_custom_call.1} parent=1 // pred_check
      _
    $region15: #{tpu_custom_call.1} parent=1 // pred_check_branch
      %44 = sbr.rel (0) target = $region17
    $region16: #{tpu_custom_call.1} parent=1 // pred_region
      %45 = dma.done [#allocation3], 512
    $region17: #{tpu_custom_call.1} parent=1 // pred_fallthru
      _
    // Predicated region
    $region18: #{tpu_custom_call.1} parent=1 // pred_check
      _
    $region19: #{tpu_custom_call.1} parent=1 // pred_check_branch
      %47 = sbr.rel (0) target = $region21
    $region20: #{tpu_custom_call.1} parent=1 // pred_region
      %48 = dma.done [#allocation6], 32768
    $region21: #{tpu_custom_call.1} parent=1 // pred_fallthru
      _
    // Predicated region
    $region22: #{tpu_custom_call.1} parent=1 // pred_check
      _
    $region23: #{tpu_custom_call.1} parent=1 // pred_check_branch
      %50 = sbr.rel (0) target = $region25
    $region24: #{tpu_custom_call.1} parent=1 // pred_region
      %51 = dma.done [#allocation6], 128
    $region25: #{tpu_custom_call.1} parent=1 // pred_fallthru
      _
    %v52 = vld [vmem:[#allocation2] sm:$0xff]
    %v53 = vld [vmem:[#allocation2 + $0x8] sm:$0xff]
    %v54 = vld [vmem:[#allocation2 + $0x10] sm:$0xff]
    %v55 = vld [vmem:[#allocation2 + $0x18] sm:$0xff]
    %v56 = vld [vmem:[#allocation5] sm:$0xff]
    %v57 = vld [vmem:[#allocation5 + $0x8] sm:$0xff]
    %v58 = vld [vmem:[#allocation5 + $0x10] sm:$0xff]
    %v59 = vld [vmem:[#allocation5 + $0x18] sm:$0xff]
    %v60 = vld [vmem:[#allocation5 + $0x20] sm:$0xff]
    %v61 = vld [vmem:[#allocation5 + $0x28] sm:$0xff]
    %v62 = vld [vmem:[#allocation5 + $0x30] sm:$0xff]
    %v63 = vld [vmem:[#allocation5 + $0x38] sm:$0xff]
    %v64 = vld [vmem:[#allocation5 + $0x40] sm:$0xff]
    %v65 = vld [vmem:[#allocation5 + $0x48] sm:$0xff]
    %v66 = vld [vmem:[#allocation5 + $0x50] sm:$0xff]
    %v67 = vld [vmem:[#allocation5 + $0x58] sm:$0xff]
    %v68 = vld [vmem:[#allocation5 + $0x60] sm:$0xff]
    %v69 = vld [vmem:[#allocation5 + $0x68] sm:$0xff]
    %v70 = vld [vmem:[#allocation5 + $0x70] sm:$0xff]
    %v71 = vld [vmem:[#allocation5 + $0x78] sm:$0xff]
    %v72 = vld [vmem:[#allocation5 + $0x80] sm:$0xff]
    %v73 = vld [vmem:[#allocation5 + $0x88] sm:$0xff]
    %v74 = vld [vmem:[#allocation5 + $0x90] sm:$0xff]
    %v75 = vld [vmem:[#allocation5 + $0x98] sm:$0xff]
    %v76 = vld [vmem:[#allocation5 + $0xa0] sm:$0xff]
    %v77 = vld [vmem:[#allocation5 + $0xa8] sm:$0xff]
    %v78 = vld [vmem:[#allocation5 + $0xb0] sm:$0xff]
    %v79 = vld [vmem:[#allocation5 + $0xb8] sm:$0xff]
    %v80 = vld [vmem:[#allocation5 + $0xc0] sm:$0xff]
    %v81 = vld [vmem:[#allocation5 + $0xc8] sm:$0xff]
    %v82 = vld [vmem:[#allocation5 + $0xd0] sm:$0xff]
    %v83 = vld [vmem:[#allocation5 + $0xd8] sm:$0xff]
    %v84 = vld [vmem:[#allocation5 + $0xe0] sm:$0xff]
    %v85 = vld [vmem:[#allocation5 + $0xe8] sm:$0xff]
    %v86 = vld [vmem:[#allocation5 + $0xf0] sm:$0xff]
    %v87 = vld [vmem:[#allocation5 + $0xf8] sm:$0xff]
    %v88 = vld [vmem:[#allocation5 + $0x100] sm:$0xff]
    %v89 = vld [vmem:[#allocation5 + $0x108] sm:$0xff]
    %v90 = vld [vmem:[#allocation5 + $0x110] sm:$0xff]
    %v91 = vld [vmem:[#allocation5 + $0x118] sm:$0xff]
    %v92 = vld [vmem:[#allocation5 + $0x120] sm:$0xff]
    %v93 = vld [vmem:[#allocation5 + $0x128] sm:$0xff]
    %v94 = vld [vmem:[#allocation5 + $0x130] sm:$0xff]
    %v95 = vld [vmem:[#allocation5 + $0x138] sm:$0xff]
    %v96 = vld [vmem:[#allocation5 + $0x140] sm:$0xff]
    %v97 = vld [vmem:[#allocation5 + $0x148] sm:$0xff]
    %v98 = vld [vmem:[#allocation5 + $0x150] sm:$0xff]
    %v99 = vld [vmem:[#allocation5 + $0x158] sm:$0xff]
    %v100 = vld [vmem:[#allocation5 + $0x160] sm:$0xff]
    %v101 = vld [vmem:[#allocation5 + $0x168] sm:$0xff]
    %v102 = vld [vmem:[#allocation5 + $0x170] sm:$0xff]
    %v103 = vld [vmem:[#allocation5 + $0x178] sm:$0xff]
    %v104 = vld [vmem:[#allocation5 + $0x180] sm:$0xff]
    %v105 = vld [vmem:[#allocation5 + $0x188] sm:$0xff]
    %v106 = vld [vmem:[#allocation5 + $0x190] sm:$0xff]
    %v107 = vld [vmem:[#allocation5 + $0x198] sm:$0xff]
    %v108 = vld [vmem:[#allocation5 + $0x1a0] sm:$0xff]
    %v109 = vld [vmem:[#allocation5 + $0x1a8] sm:$0xff]
    %v110 = vld [vmem:[#allocation5 + $0x1b0] sm:$0xff]
    %v111 = vld [vmem:[#allocation5 + $0x1b8] sm:$0xff]
    %v112 = vld [vmem:[#allocation5 + $0x1c0] sm:$0xff]
    %v113 = vld [vmem:[#allocation5 + $0x1c8] sm:$0xff]
    %v114 = vld [vmem:[#allocation5 + $0x1d0] sm:$0xff]
    %v115 = vld [vmem:[#allocation5 + $0x1d8] sm:$0xff]
    %v116 = vld [vmem:[#allocation5 + $0x1e0] sm:$0xff]
    %v117 = vld [vmem:[#allocation5 + $0x1e8] sm:$0xff]
    %v118 = vld [vmem:[#allocation5 + $0x1f0] sm:$0xff]
    %v119 = vld [vmem:[#allocation5 + $0x1f8] sm:$0xff]
    %v120 = vld [vmem:[#allocation5 + $0x200] sm:$0xff]
    %v121 = vld [vmem:[#allocation5 + $0x208] sm:$0xff]
    %v122 = vld [vmem:[#allocation5 + $0x210] sm:$0xff]
    %v123 = vld [vmem:[#allocation5 + $0x218] sm:$0xff]
    %v124 = vld [vmem:[#allocation5 + $0x220] sm:$0xff]
    %v125 = vld [vmem:[#allocation5 + $0x228] sm:$0xff]
    %v126 = vld [vmem:[#allocation5 + $0x230] sm:$0xff]
    %v127 = vld [vmem:[#allocation5 + $0x238] sm:$0xff]
    %v128 = vld [vmem:[#allocation5 + $0x240] sm:$0xff]
    %v129 = vld [vmem:[#allocation5 + $0x248] sm:$0xff]
    %v130 = vld [vmem:[#allocation5 + $0x250] sm:$0xff]
    %v131 = vld [vmem:[#allocation5 + $0x258] sm:$0xff]
    %v132 = vld [vmem:[#allocation5 + $0x260] sm:$0xff]
    %v133 = vld [vmem:[#allocation5 + $0x268] sm:$0xff]
    %v134 = vld [vmem:[#allocation5 + $0x270] sm:$0xff]
    %v135 = vld [vmem:[#allocation5 + $0x278] sm:$0xff]
    %v136 = vld [vmem:[#allocation5 + $0x280] sm:$0xff]
    %v137 = vld [vmem:[#allocation5 + $0x288] sm:$0xff]
    %v138 = vld [vmem:[#allocation5 + $0x290] sm:$0xff]
    %v139 = vld [vmem:[#allocation5 + $0x298] sm:$0xff]
    %v140 = vld [vmem:[#allocation5 + $0x2a0] sm:$0xff]
    %v141 = vld [vmem:[#allocation5 + $0x2a8] sm:$0xff]
    %v142 = vld [vmem:[#allocation5 + $0x2b0] sm:$0xff]
    %v143 = vld [vmem:[#allocation5 + $0x2b8] sm:$0xff]
    %v144 = vld [vmem:[#allocation5 + $0x2c0] sm:$0xff]
    %v145 = vld [vmem:[#allocation5 + $0x2c8] sm:$0xff]
    %v146 = vld [vmem:[#allocation5 + $0x2d0] sm:$0xff]
    %v147 = vld [vmem:[#allocation5 + $0x2d8] sm:$0xff]
    %v148 = vld [vmem:[#allocation5 + $0x2e0] sm:$0xff]
    %v149 = vld [vmem:[#allocation5 + $0x2e8] sm:$0xff]
    %v150 = vld [vmem:[#allocation5 + $0x2f0] sm:$0xff]
    %v151 = vld [vmem:[#allocation5 + $0x2f8] sm:$0xff]
    %v152 = vld [vmem:[#allocation5 + $0x300] sm:$0xff]
    %v153 = vld [vmem:[#allocation5 + $0x308] sm:$0xff]
    %v154 = vld [vmem:[#allocation5 + $0x310] sm:$0xff]
    %v155 = vld [vmem:[#allocation5 + $0x318] sm:$0xff]
    %v156 = vld [vmem:[#allocation5 + $0x320] sm:$0xff]
    %v157 = vld [vmem:[#allocation5 + $0x328] sm:$0xff]
    %v158 = vld [vmem:[#allocation5 + $0x330] sm:$0xff]
    %v159 = vld [vmem:[#allocation5 + $0x338] sm:$0xff]
    %v160 = vld [vmem:[#allocation5 + $0x340] sm:$0xff]
    %v161 = vld [vmem:[#allocation5 + $0x348] sm:$0xff]
    %v162 = vld [vmem:[#allocation5 + $0x350] sm:$0xff]
    %v163 = vld [vmem:[#allocation5 + $0x358] sm:$0xff]
    %v164 = vld [vmem:[#allocation5 + $0x360] sm:$0xff]
    %v165 = vld [vmem:[#allocation5 + $0x368] sm:$0xff]
    %v166 = vld [vmem:[#allocation5 + $0x370] sm:$0xff]
    %v167 = vld [vmem:[#allocation5 + $0x378] sm:$0xff]
    %v168 = vld [vmem:[#allocation5 + $0x380] sm:$0xff]
    %v169 = vld [vmem:[#allocation5 + $0x388] sm:$0xff]
    %v170 = vld [vmem:[#allocation5 + $0x390] sm:$0xff]
    %v171 = vld [vmem:[#allocation5 + $0x398] sm:$0xff]
    %v172 = vld [vmem:[#allocation5 + $0x3a0] sm:$0xff]
    %v173 = vld [vmem:[#allocation5 + $0x3a8] sm:$0xff]
    %v174 = vld [vmem:[#allocation5 + $0x3b0] sm:$0xff]
    %v175 = vld [vmem:[#allocation5 + $0x3b8] sm:$0xff]
    %v176 = vld [vmem:[#allocation5 + $0x3c0] sm:$0xff]
    %v177 = vld [vmem:[#allocation5 + $0x3c8] sm:$0xff]
    %v178 = vld [vmem:[#allocation5 + $0x3d0] sm:$0xff]
    %v179 = vld [vmem:[#allocation5 + $0x3d8] sm:$0xff]
    %v180 = vld [vmem:[#allocation5 + $0x3e0] sm:$0xff]
    %v181 = vld [vmem:[#allocation5 + $0x3e8] sm:$0xff]
    %v182 = vld [vmem:[#allocation5 + $0x3f0] sm:$0xff]
    %v183 = vld [vmem:[#allocation5 + $0x3f8] sm:$0xff]
    %v184 = vld [vmem:[#allocation5 + $0x400] sm:$0xff]
    %v185 = vld [vmem:[#allocation5 + $0x408] sm:$0xff]
    %v186 = vld [vmem:[#allocation5 + $0x410] sm:$0xff]
    %v187 = vld [vmem:[#allocation5 + $0x418] sm:$0xff]
    %v188 = vld [vmem:[#allocation5 + $0x420] sm:$0xff]
    %v189 = vld [vmem:[#allocation5 + $0x428] sm:$0xff]
    %v190 = vld [vmem:[#allocation5 + $0x430] sm:$0xff]
    %v191 = vld [vmem:[#allocation5 + $0x438] sm:$0xff]
    %v192 = vld [vmem:[#allocation5 + $0x440] sm:$0xff]
    %v193 = vld [vmem:[#allocation5 + $0x448] sm:$0xff]
    %v194 = vld [vmem:[#allocation5 + $0x450] sm:$0xff]
    %v195 = vld [vmem:[#allocation5 + $0x458] sm:$0xff]
    %v196 = vld [vmem:[#allocation5 + $0x460] sm:$0xff]
    %v197 = vld [vmem:[#allocation5 + $0x468] sm:$0xff]
    %v198 = vld [vmem:[#allocation5 + $0x470] sm:$0xff]
    %v199 = vld [vmem:[#allocation5 + $0x478] sm:$0xff]
    %v200 = vld [vmem:[#allocation5 + $0x480] sm:$0xff]
    %v201 = vld [vmem:[#allocation5 + $0x488] sm:$0xff]
    %v202 = vld [vmem:[#allocation5 + $0x490] sm:$0xff]
    %v203 = vld [vmem:[#allocation5 + $0x498] sm:$0xff]
    %v204 = vld [vmem:[#allocation5 + $0x4a0] sm:$0xff]
    %v205 = vld [vmem:[#allocation5 + $0x4a8] sm:$0xff]
    %v206 = vld [vmem:[#allocation5 + $0x4b0] sm:$0xff]
    %v207 = vld [vmem:[#allocation5 + $0x4b8] sm:$0xff]
    %v208 = vld [vmem:[#allocation5 + $0x4c0] sm:$0xff]
    %v209 = vld [vmem:[#allocation5 + $0x4c8] sm:$0xff]
    %v210 = vld [vmem:[#allocation5 + $0x4d0] sm:$0xff]
    %v211 = vld [vmem:[#allocation5 + $0x4d8] sm:$0xff]
    %v212 = vld [vmem:[#allocation5 + $0x4e0] sm:$0xff]
    %v213 = vld [vmem:[#allocation5 + $0x4e8] sm:$0xff]
    %v214 = vld [vmem:[#allocation5 + $0x4f0] sm:$0xff]
    %v215 = vld [vmem:[#allocation5 + $0x4f8] sm:$0xff]
    %v216 = vld [vmem:[#allocation5 + $0x500] sm:$0xff]
    %v217 = vld [vmem:[#allocation5 + $0x508] sm:$0xff]
    %v218 = vld [vmem:[#allocation5 + $0x510] sm:$0xff]
    %v219 = vld [vmem:[#allocation5 + $0x518] sm:$0xff]
    %v220 = vld [vmem:[#allocation5 + $0x520] sm:$0xff]
    %v221 = vld [vmem:[#allocation5 + $0x528] sm:$0xff]
    %v222 = vld [vmem:[#allocation5 + $0x530] sm:$0xff]
    %v223 = vld [vmem:[#allocation5 + $0x538] sm:$0xff]
    %v224 = vld [vmem:[#allocation5 + $0x540] sm:$0xff]
    %v225 = vld [vmem:[#allocation5 + $0x548] sm:$0xff]
    %v226 = vld [vmem:[#allocation5 + $0x550] sm:$0xff]
    %v227 = vld [vmem:[#allocation5 + $0x558] sm:$0xff]
    %v228 = vld [vmem:[#allocation5 + $0x560] sm:$0xff]
    %v229 = vld [vmem:[#allocation5 + $0x568] sm:$0xff]
    %v230 = vld [vmem:[#allocation5 + $0x570] sm:$0xff]
    %v231 = vld [vmem:[#allocation5 + $0x578] sm:$0xff]
    %v232 = vld [vmem:[#allocation5 + $0x580] sm:$0xff]
    %v233 = vld [vmem:[#allocation5 + $0x588] sm:$0xff]
    %v234 = vld [vmem:[#allocation5 + $0x590] sm:$0xff]
    %v235 = vld [vmem:[#allocation5 + $0x598] sm:$0xff]
    %v236 = vld [vmem:[#allocation5 + $0x5a0] sm:$0xff]
    %v237 = vld [vmem:[#allocation5 + $0x5a8] sm:$0xff]
    %v238 = vld [vmem:[#allocation5 + $0x5b0] sm:$0xff]
    %v239 = vld [vmem:[#allocation5 + $0x5b8] sm:$0xff]
    %v240 = vld [vmem:[#allocation5 + $0x5c0] sm:$0xff]
    %v241 = vld [vmem:[#allocation5 + $0x5c8] sm:$0xff]
    %v242 = vld [vmem:[#allocation5 + $0x5d0] sm:$0xff]
    %v243 = vld [vmem:[#allocation5 + $0x5d8] sm:$0xff]
    %v244 = vld [vmem:[#allocation5 + $0x5e0] sm:$0xff]
    %v245 = vld [vmem:[#allocation5 + $0x5e8] sm:$0xff]
    %v246 = vld [vmem:[#allocation5 + $0x5f0] sm:$0xff]
    %v247 = vld [vmem:[#allocation5 + $0x5f8] sm:$0xff]
    %v248 = vld [vmem:[#allocation5 + $0x600] sm:$0xff]
    %v249 = vld [vmem:[#allocation5 + $0x608] sm:$0xff]
    %v250 = vld [vmem:[#allocation5 + $0x610] sm:$0xff]
    %v251 = vld [vmem:[#allocation5 + $0x618] sm:$0xff]
    %v252 = vld [vmem:[#allocation5 + $0x620] sm:$0xff]
    %v253 = vld [vmem:[#allocation5 + $0x628] sm:$0xff]
    %v254 = vld [vmem:[#allocation5 + $0x630] sm:$0xff]
    %v255 = vld [vmem:[#allocation5 + $0x638] sm:$0xff]
    %v256 = vld [vmem:[#allocation5 + $0x640] sm:$0xff]
    %v257 = vld [vmem:[#allocation5 + $0x648] sm:$0xff]
    %v258 = vld [vmem:[#allocation5 + $0x650] sm:$0xff]
    %v259 = vld [vmem:[#allocation5 + $0x658] sm:$0xff]
    %v260 = vld [vmem:[#allocation5 + $0x660] sm:$0xff]
    %v261 = vld [vmem:[#allocation5 + $0x668] sm:$0xff]
    %v262 = vld [vmem:[#allocation5 + $0x670] sm:$0xff]
    %v263 = vld [vmem:[#allocation5 + $0x678] sm:$0xff]
    %v264 = vld [vmem:[#allocation5 + $0x680] sm:$0xff]
    %v265 = vld [vmem:[#allocation5 + $0x688] sm:$0xff]
    %v266 = vld [vmem:[#allocation5 + $0x690] sm:$0xff]
    %v267 = vld [vmem:[#allocation5 + $0x698] sm:$0xff]
    %v268 = vld [vmem:[#allocation5 + $0x6a0] sm:$0xff]
    %v269 = vld [vmem:[#allocation5 + $0x6a8] sm:$0xff]
    %v270 = vld [vmem:[#allocation5 + $0x6b0] sm:$0xff]
    %v271 = vld [vmem:[#allocation5 + $0x6b8] sm:$0xff]
    %v272 = vld [vmem:[#allocation5 + $0x6c0] sm:$0xff]
    %v273 = vld [vmem:[#allocation5 + $0x6c8] sm:$0xff]
    %v274 = vld [vmem:[#allocation5 + $0x6d0] sm:$0xff]
    %v275 = vld [vmem:[#allocation5 + $0x6d8] sm:$0xff]
    %v276 = vld [vmem:[#allocation5 + $0x6e0] sm:$0xff]
    %v277 = vld [vmem:[#allocation5 + $0x6e8] sm:$0xff]
    %v278 = vld [vmem:[#allocation5 + $0x6f0] sm:$0xff]
    %v279 = vld [vmem:[#allocation5 + $0x6f8] sm:$0xff]
    %v280 = vld [vmem:[#allocation5 + $0x700] sm:$0xff]
    %v281 = vld [vmem:[#allocation5 + $0x708] sm:$0xff]
    %v282 = vld [vmem:[#allocation5 + $0x710] sm:$0xff]
    %v283 = vld [vmem:[#allocation5 + $0x718] sm:$0xff]
    %v284 = vld [vmem:[#allocation5 + $0x720] sm:$0xff]
    %v285 = vld [vmem:[#allocation5 + $0x728] sm:$0xff]
    %v286 = vld [vmem:[#allocation5 + $0x730] sm:$0xff]
    %v287 = vld [vmem:[#allocation5 + $0x738] sm:$0xff]
    %v288 = vld [vmem:[#allocation5 + $0x740] sm:$0xff]
    %v289 = vld [vmem:[#allocation5 + $0x748] sm:$0xff]
    %v290 = vld [vmem:[#allocation5 + $0x750] sm:$0xff]
    %v291 = vld [vmem:[#allocation5 + $0x758] sm:$0xff]
    %v292 = vld [vmem:[#allocation5 + $0x760] sm:$0xff]
    %v293 = vld [vmem:[#allocation5 + $0x768] sm:$0xff]
    %v294 = vld [vmem:[#allocation5 + $0x770] sm:$0xff]
    %v295 = vld [vmem:[#allocation5 + $0x778] sm:$0xff]
    %v296 = vld [vmem:[#allocation5 + $0x780] sm:$0xff]
    %v297 = vld [vmem:[#allocation5 + $0x788] sm:$0xff]
    %v298 = vld [vmem:[#allocation5 + $0x790] sm:$0xff]
    %v299 = vld [vmem:[#allocation5 + $0x798] sm:$0xff]
    %v300 = vld [vmem:[#allocation5 + $0x7a0] sm:$0xff]
    %v301 = vld [vmem:[#allocation5 + $0x7a8] sm:$0xff]
    %v302 = vld [vmem:[#allocation5 + $0x7b0] sm:$0xff]
    %v303 = vld [vmem:[#allocation5 + $0x7b8] sm:$0xff]
    %v304 = vld [vmem:[#allocation5 + $0x7c0] sm:$0xff]
    %v305 = vld [vmem:[#allocation5 + $0x7c8] sm:$0xff]
    %v306 = vld [vmem:[#allocation5 + $0x7d0] sm:$0xff]
    %v307 = vld [vmem:[#allocation5 + $0x7d8] sm:$0xff]
    %v308 = vld [vmem:[#allocation5 + $0x7e0] sm:$0xff]
    %v309 = vld [vmem:[#allocation5 + $0x7e8] sm:$0xff]
    %v310 = vld [vmem:[#allocation5 + $0x7f0] sm:$0xff]
    %v311 = vld [vmem:[#allocation5 + $0x7f8] sm:$0xff]
    %312 = vmatprep.subr.mxu0 %v57
    %313 = vmatpush1.msra.mxu0 %v56
    %314 = vmatprep.subr.mxu0 %v61
    %315 = vmatpush1.msra.mxu0 %v60
    %316 = vmatprep.subr.mxu0 %v65
    %317 = vmatpush1.msra.mxu0 %v64
    %318 = vmatprep.subr.mxu0 %v69
    %319 = vmatpush1.msra.mxu0 %v68
    %320 = vmatprep.subr.mxu0 %v73
    %321 = vmatpush1.msra.mxu0 %v72
    %322 = vmatprep.subr.mxu0 %v77
    %323 = vmatpush1.msra.mxu0 %v76
    %324 = vmatprep.subr.mxu0 %v81
    %325 = vmatpush1.msra.mxu0 %v80
    %326 = vmatprep.subr.mxu0 %v85
    %327 = vmatpush1.msra.mxu0 %v84
    %328 = vmatprep.subr.mxu0 %v89
    %329 = vmatpush1.msra.mxu0 %v88
    %330 = vmatprep.subr.mxu0 %v93
    %331 = vmatpush1.msra.mxu0 %v92
    %332 = vmatprep.subr.mxu0 %v97
    %333 = vmatpush1.msra.mxu0 %v96
    %334 = vmatprep.subr.mxu0 %v101
    %335 = vmatpush1.msra.mxu0 %v100
    %336 = vmatprep.subr.mxu0 %v105
    %337 = vmatpush1.msra.mxu0 %v104
    %338 = vmatprep.subr.mxu0 %v109
    %339 = vmatpush1.msra.mxu0 %v108
    %340 = vmatprep.subr.mxu0 %v113
    %341 = vmatpush1.msra.mxu0 %v112
    %342 = vmatprep.subr.mxu0 %v117
    %343 = vmatpush1.msra.mxu0 %v116
    %344 = vmatprep.subr.mxu0 %v121
    %345 = vmatpush1.msra.mxu0 %v120
    %346 = vmatprep.subr.mxu0 %v125
    %347 = vmatpush1.msra.mxu0 %v124
    %348 = vmatprep.subr.mxu0 %v129
    %349 = vmatpush1.msra.mxu0 %v128
    %350 = vmatprep.subr.mxu0 %v133
    %351 = vmatpush1.msra.mxu0 %v132
    %352 = vmatprep.subr.mxu0 %v137
    %353 = vmatpush1.msra.mxu0 %v136
    %354 = vmatprep.subr.mxu0 %v141
    %355 = vmatpush1.msra.mxu0 %v140
    %356 = vmatprep.subr.mxu0 %v145
    %357 = vmatpush1.msra.mxu0 %v144
    %358 = vmatprep.subr.mxu0 %v149
    %359 = vmatpush1.msra.mxu0 %v148
    %360 = vmatprep.subr.mxu0 %v153
    %361 = vmatpush1.msra.mxu0 %v152
    %362 = vmatprep.subr.mxu0 %v157
    %363 = vmatpush1.msra.mxu0 %v156
    %364 = vmatprep.subr.mxu0 %v161
    %365 = vmatpush1.msra.mxu0 %v160
    %366 = vmatprep.subr.mxu0 %v165
    %367 = vmatpush1.msra.mxu0 %v164
    %368 = vmatprep.subr.mxu0 %v169
    %369 = vmatpush1.msra.mxu0 %v168
    %370 = vmatprep.subr.mxu0 %v173
    %371 = vmatpush1.msra.mxu0 %v172
    %372 = vmatprep.subr.mxu0 %v177
    %373 = vmatpush1.msra.mxu0 %v176
    %374 = vmatprep.subr.mxu0 %v181
    %375 = vmatpush1.msra.mxu0 %v180
    %376 = vmatprep.mubr.f32.mxu0 %v53
    %377 = vmatmul.mubr.f32.gmra.mrb[0].mxu0 %v52
    %v378 = vpop.f32.mrb[0].mxu0
    %v379 = vadd.f32 0.0, %v378
    %v380 = vpop.f32.mrb[0].mxu0
    %v381 = vadd.f32 0.0, %v380
    %382 = vdwg.mxu0
    %383 = vmatprep.subr.mxu0 %v185
    %384 = vmatpush1.msra.mxu0 %v184
    %385 = vmatprep.subr.mxu0 %v189
    %386 = vmatpush1.msra.mxu0 %v188
    %387 = vmatprep.subr.mxu0 %v193
    %388 = vmatpush1.msra.mxu0 %v192
    %389 = vmatprep.subr.mxu0 %v197
    %390 = vmatpush1.msra.mxu0 %v196
    %391 = vmatprep.subr.mxu0 %v201
    %392 = vmatpush1.msra.mxu0 %v200
    %393 = vmatprep.subr.mxu0 %v205
    %394 = vmatpush1.msra.mxu0 %v204
    %395 = vmatprep.subr.mxu0 %v209
    %396 = vmatpush1.msra.mxu0 %v208
    %397 = vmatprep.subr.mxu0 %v213
    %398 = vmatpush1.msra.mxu0 %v212
    %399 = vmatprep.subr.mxu0 %v217
    %400 = vmatpush1.msra.mxu0 %v216
    %401 = vmatprep.subr.mxu0 %v221
    %402 = vmatpush1.msra.mxu0 %v220
    %403 = vmatprep.subr.mxu0 %v225
    %404 = vmatpush1.msra.mxu0 %v224
    %405 = vmatprep.subr.mxu0 %v229
    %406 = vmatpush1.msra.mxu0 %v228
    %407 = vmatprep.subr.mxu0 %v233
    %408 = vmatpush1.msra.mxu0 %v232
    %409 = vmatprep.subr.mxu0 %v237
    %410 = vmatpush1.msra.mxu0 %v236
    %411 = vmatprep.subr.mxu0 %v241
    %412 = vmatpush1.msra.mxu0 %v240
    %413 = vmatprep.subr.mxu0 %v245
    %414 = vmatpush1.msra.mxu0 %v244
    %415 = vmatprep.subr.mxu0 %v249
    %416 = vmatpush1.msra.mxu0 %v248
    %417 = vmatprep.subr.mxu0 %v253
    %418 = vmatpush1.msra.mxu0 %v252
    %419 = vmatprep.subr.mxu0 %v257
    %420 = vmatpush1.msra.mxu0 %v256
    %421 = vmatprep.subr.mxu0 %v261
    %422 = vmatpush1.msra.mxu0 %v260
    %423 = vmatprep.subr.mxu0 %v265
    %424 = vmatpush1.msra.mxu0 %v264
    %425 = vmatprep.subr.mxu0 %v269
    %426 = vmatpush1.msra.mxu0 %v268
    %427 = vmatprep.subr.mxu0 %v273
    %428 = vmatpush1.msra.mxu0 %v272
    %429 = vmatprep.subr.mxu0 %v277
    %430 = vmatpush1.msra.mxu0 %v276
    %431 = vmatprep.subr.mxu0 %v281
    %432 = vmatpush1.msra.mxu0 %v280
    %433 = vmatprep.subr.mxu0 %v285
    %434 = vmatpush1.msra.mxu0 %v284
    %435 = vmatprep.subr.mxu0 %v289
    %436 = vmatpush1.msra.mxu0 %v288
    %437 = vmatprep.subr.mxu0 %v293
    %438 = vmatpush1.msra.mxu0 %v292
    %439 = vmatprep.subr.mxu0 %v297
    %440 = vmatpush1.msra.mxu0 %v296
    %441 = vmatprep.subr.mxu0 %v301
    %442 = vmatpush1.msra.mxu0 %v300
    %443 = vmatprep.subr.mxu0 %v305
    %444 = vmatpush1.msra.mxu0 %v304
    %445 = vmatprep.subr.mxu0 %v309
    %446 = vmatpush1.msra.mxu0 %v308
    %447 = vmatprep.mubr.f32.mxu0 %v55
    %448 = vmatmul.mubr.f32.gmra.mrb[0].mxu0 %v54
    %v449 = vpop.f32.mrb[0].mxu0
    %v450 = vadd.f32 %v379, %v449
    %v451 = vpop.f32.mrb[0].mxu0
    %v452 = vadd.f32 %v381, %v451
    %453 = vdwg.mxu0
    %454 = vmatprep.subr.mxu0 %v59
    %455 = vmatpush1.msra.mxu0 %v58
    %456 = vmatprep.subr.mxu0 %v63
    %457 = vmatpush1.msra.mxu0 %v62
    %458 = vmatprep.subr.mxu0 %v67
    %459 = vmatpush1.msra.mxu0 %v66
    %460 = vmatprep.subr.mxu0 %v71
    %461 = vmatpush1.msra.mxu0 %v70
    %462 = vmatprep.subr.mxu0 %v75
    %463 = vmatpush1.msra.mxu0 %v74
    %464 = vmatprep.subr.mxu0 %v79
    %465 = vmatpush1.msra.mxu0 %v78
    %466 = vmatprep.subr.mxu0 %v83
    %467 = vmatpush1.msra.mxu0 %v82
    %468 = vmatprep.subr.mxu0 %v87
    %469 = vmatpush1.msra.mxu0 %v86
    %470 = vmatprep.subr.mxu0 %v91
    %471 = vmatpush1.msra.mxu0 %v90
    %472 = vmatprep.subr.mxu0 %v95
    %473 = vmatpush1.msra.mxu0 %v94
    %474 = vmatprep.subr.mxu0 %v99
    %475 = vmatpush1.msra.mxu0 %v98
    %476 = vmatprep.subr.mxu0 %v103
    %477 = vmatpush1.msra.mxu0 %v102
    %478 = vmatprep.subr.mxu0 %v107
    %479 = vmatpush1.msra.mxu0 %v106
    %480 = vmatprep.subr.mxu0 %v111
    %481 = vmatpush1.msra.mxu0 %v110
    %482 = vmatprep.subr.mxu0 %v115
    %483 = vmatpush1.msra.mxu0 %v114
    %484 = vmatprep.subr.mxu0 %v119
    %485 = vmatpush1.msra.mxu0 %v118
    %486 = vmatprep.subr.mxu0 %v123
    %487 = vmatpush1.msra.mxu0 %v122
    %488 = vmatprep.subr.mxu0 %v127
    %489 = vmatpush1.msra.mxu0 %v126
    %490 = vmatprep.subr.mxu0 %v131
    %491 = vmatpush1.msra.mxu0 %v130
    %492 = vmatprep.subr.mxu0 %v135
    %493 = vmatpush1.msra.mxu0 %v134
    %494 = vmatprep.subr.mxu0 %v139
    %495 = vmatpush1.msra.mxu0 %v138
    %496 = vmatprep.subr.mxu0 %v143
    %497 = vmatpush1.msra.mxu0 %v142
    %498 = vmatprep.subr.mxu0 %v147
    %499 = vmatpush1.msra.mxu0 %v146
    %500 = vmatprep.subr.mxu0 %v151
    %501 = vmatpush1.msra.mxu0 %v150
    %502 = vmatprep.subr.mxu0 %v155
    %503 = vmatpush1.msra.mxu0 %v154
    %504 = vmatprep.subr.mxu0 %v159
    %505 = vmatpush1.msra.mxu0 %v158
    %506 = vmatprep.subr.mxu0 %v163
    %507 = vmatpush1.msra.mxu0 %v162
    %508 = vmatprep.subr.mxu0 %v167
    %509 = vmatpush1.msra.mxu0 %v166
    %510 = vmatprep.subr.mxu0 %v171
    %511 = vmatpush1.msra.mxu0 %v170
    %512 = vmatprep.subr.mxu0 %v175
    %513 = vmatpush1.msra.mxu0 %v174
    %514 = vmatprep.subr.mxu0 %v179
    %515 = vmatpush1.msra.mxu0 %v178
    %516 = vmatprep.subr.mxu0 %v183
    %517 = vmatpush1.msra.mxu0 %v182
    %518 = vmatprep.mubr.f32.mxu0 %v53
    %519 = vmatmul.mubr.f32.gmra.mrb[0].mxu0 %v52
    %v520 = vpop.f32.mrb[0].mxu0
    %v521 = vadd.f32 0.0, %v520
    %v522 = vpop.f32.mrb[0].mxu0
    %v523 = vadd.f32 0.0, %v522
    %524 = vdwg.mxu0
    %525 = vmatprep.subr.mxu0 %v187
    %526 = vmatpush1.msra.mxu0 %v186
    %527 = vmatprep.subr.mxu0 %v191
    %528 = vmatpush1.msra.mxu0 %v190
    %529 = vmatprep.subr.mxu0 %v195
    %530 = vmatpush1.msra.mxu0 %v194
    %531 = vmatprep.subr.mxu0 %v199
    %532 = vmatpush1.msra.mxu0 %v198
    %533 = vmatprep.subr.mxu0 %v203
    %534 = vmatpush1.msra.mxu0 %v202
    %535 = vmatprep.subr.mxu0 %v207
    %536 = vmatpush1.msra.mxu0 %v206
    %537 = vmatprep.subr.mxu0 %v211
    %538 = vmatpush1.msra.mxu0 %v210
    %539 = vmatprep.subr.mxu0 %v215
    %540 = vmatpush1.msra.mxu0 %v214
    %541 = vmatprep.subr.mxu0 %v219
    %542 = vmatpush1.msra.mxu0 %v218
    %543 = vmatprep.subr.mxu0 %v223
    %544 = vmatpush1.msra.mxu0 %v222
    %545 = vmatprep.subr.mxu0 %v227
    %546 = vmatpush1.msra.mxu0 %v226
    %547 = vmatprep.subr.mxu0 %v231
    %548 = vmatpush1.msra.mxu0 %v230
    %549 = vmatprep.subr.mxu0 %v235
    %550 = vmatpush1.msra.mxu0 %v234
    %551 = vmatprep.subr.mxu0 %v239
    %552 = vmatpush1.msra.mxu0 %v238
    %553 = vmatprep.subr.mxu0 %v243
    %554 = vmatpush1.msra.mxu0 %v242
    %555 = vmatprep.subr.mxu0 %v247
    %556 = vmatpush1.msra.mxu0 %v246
    %557 = vmatprep.subr.mxu0 %v251
    %558 = vmatpush1.msra.mxu0 %v250
    %559 = vmatprep.subr.mxu0 %v255
    %560 = vmatpush1.msra.mxu0 %v254
    %561 = vmatprep.subr.mxu0 %v259
    %562 = vmatpush1.msra.mxu0 %v258
    %563 = vmatprep.subr.mxu0 %v263
    %564 = vmatpush1.msra.mxu0 %v262
    %565 = vmatprep.subr.mxu0 %v267
    %566 = vmatpush1.msra.mxu0 %v266
    %567 = vmatprep.subr.mxu0 %v271
    %568 = vmatpush1.msra.mxu0 %v270
    %569 = vmatprep.subr.mxu0 %v275
    %570 = vmatpush1.msra.mxu0 %v274
    %571 = vmatprep.subr.mxu0 %v279
    %572 = vmatpush1.msra.mxu0 %v278
    %573 = vmatprep.subr.mxu0 %v283
    %574 = vmatpush1.msra.mxu0 %v282
    %575 = vmatprep.subr.mxu0 %v287
    %576 = vmatpush1.msra.mxu0 %v286
    %577 = vmatprep.subr.mxu0 %v291
    %578 = vmatpush1.msra.mxu0 %v290
    %579 = vmatprep.subr.mxu0 %v295
    %580 = vmatpush1.msra.mxu0 %v294
    %581 = vmatprep.subr.mxu0 %v299
    %582 = vmatpush1.msra.mxu0 %v298
    %583 = vmatprep.subr.mxu0 %v303
    %584 = vmatpush1.msra.mxu0 %v302
    %585 = vmatprep.subr.mxu0 %v307
    %586 = vmatpush1.msra.mxu0 %v306
    %587 = vmatprep.subr.mxu0 %v311
    %588 = vmatpush1.msra.mxu0 %v310
    %589 = vmatprep.mubr.f32.mxu0 %v55
    %590 = vmatmul.mubr.f32.gmra.mrb[0].mxu0 %v54
    %v591 = vpop.f32.mrb[0].mxu0
    %v592 = vadd.f32 %v521, %v591
    %v593 = vpop.f32.mrb[0].mxu0
    %v594 = vadd.f32 %v523, %v593
    %595 = vdwg.mxu0
    %v596 = vrot.slane %v450, 4
    %v597 = vadd.f32 %v450, %v596
    %v598 = vrot.slane %v597, 2
    %v599 = vadd.f32 %v597, %v598
    %v600 = vrot.slane %v599, 1
    %v601 = vadd.f32 %v599, %v600
    %v602 = vrot.slane %v452, 4
    %v603 = vadd.f32 %v452, %v602
    %v604 = vrot.slane %v603, 2
    %v605 = vadd.f32 %v603, %v604
    %v606 = vrot.slane %v605, 1
    %v607 = vadd.f32 %v605, %v606
    %v608 = vrot.slane %v592, 4
    %v609 = vadd.f32 %v592, %v608
    %v610 = vrot.slane %v609, 2
    %v611 = vadd.f32 %v609, %v610
    %v612 = vrot.slane %v611, 1
    %v613 = vadd.f32 %v611, %v612
    %v614 = vrot.slane %v594, 4
    %v615 = vadd.f32 %v594, %v614
    %v616 = vrot.slane %v615, 2
    %v617 = vadd.f32 %v615, %v616
    %v618 = vrot.slane %v617, 1
    %v619 = vadd.f32 %v617, %v618
    %v620 = vmul.f32 %v601, 0.125
    %v621 = vmul.f32 %v607, 0.125
    %v622 = vmul.f32 %v613, 0.125
    %v623 = vmul.f32 %v619, 0.125
    %v624 = vsub.f32 %v450, %v620
    %v625 = vsub.f32 %v452, %v621
    %v626 = vsub.f32 %v592, %v622
    %v627 = vsub.f32 %v594, %v623
    %v628 = vmul.f32 %v624, %v624
    %v629 = vmul.f32 %v625, %v625
    %v630 = vmul.f32 %v626, %v626
    %v631 = vmul.f32 %v627, %v627
    %v632 = vrot.slane %v628, 4
    %v633 = vadd.f32 %v628, %v632
    %v634 = vrot.slane %v633, 2
    %v635 = vadd.f32 %v633, %v634
    %v636 = vrot.slane %v635, 1
    %v637 = vadd.f32 %v635, %v636
    %v638 = vrot.slane %v629, 4
    %v639 = vadd.f32 %v629, %v638
    %v640 = vrot.slane %v639, 2
    %v641 = vadd.f32 %v639, %v640
    %v642 = vrot.slane %v641, 1
    %v643 = vadd.f32 %v641, %v642
    %v644 = vrot.slane %v630, 4
    %v645 = vadd.f32 %v630, %v644
    %v646 = vrot.slane %v645, 2
    %v647 = vadd.f32 %v645, %v646
    %v648 = vrot.slane %v647, 1
    %v649 = vadd.f32 %v647, %v648
    %v650 = vrot.slane %v631, 4
    %v651 = vadd.f32 %v631, %v650
    %v652 = vrot.slane %v651, 2
    %v653 = vadd.f32 %v651, %v652
    %v654 = vrot.slane %v653, 1
    %v655 = vadd.f32 %v653, %v654
    %v656 = vmul.f32 %v637, 0.125
    %v657 = vmul.f32 %v643, 0.125
    %v658 = vmul.f32 %v649, 0.125
    %v659 = vmul.f32 %v655, 0.125
    %v660 = vadd.f32 %v656, 1e-05
    %v661 = vadd.f32 %v657, 1e-05
    %v662 = vadd.f32 %v658, 1e-05
    %v663 = vadd.f32 %v659, 1e-05
    %v664 = vrsqrt.pop %v660
    %v665 = vrsqrt.pop %v661
    %v666 = vrsqrt.pop %v662
    %v667 = vrsqrt.pop %v663
    %v668 = vld [vmem:[#allocation7] ss:$2 sm:$0xf]
    %s669 = scalar_lea.vmem [#allocation7], 1
    %v670 = vld [vmem:[%s669] ss:$2 sm:$0xf]
    %v675 = vcombine.low %v664, %v665
    %v676 = vcombine.low %v666, %v667
    %v678 = vunpack.c.l.s4 1966171168
    %v679 = vunpack.c.0.s8 %v678
    %v680 = vlaneseq
    %v681 = vshrl.u32 %v680, 7
    %v682 = vsub.s32 %v679, %v681
    %v683 = vrot.slane %v675, %v682
    %v685 = vunpack.c.l.s4 1966171168
    %v686 = vunpack.c.0.s8 %v685
    %v687 = vlaneseq
    %v688 = vshrl.u32 %v687, 7
    %v689 = vsub.s32 %v686, %v688
    %v690 = vrot.slane %v676, %v689
    %v691 = vcombine.low %v683, %v690
    %v693 = vunpack.c.l.s4 1966171168
    %v694 = vunpack.c.0.s8 %v693
    %v695 = vlaneseq
    %v696 = vshrl.u32 %v695, 7
    %v697 = vsub.s32 %v694, %v696
    %v698 = vrot.slane %v691, %v697
    %v700 = vmul.f32 %v668, %v698
    %v702 = vlaneseq
    %v703 = vshrl.u32 %v702, 7
    %v704 = vsub.s32 0, %v703
    %v705 = vrot.slane %v700, %v704
    %v706 = vlaneseq
    %v707 = vshrl.u32 %v706, 7
    %v708 = vsub.s32 1, %v707
    %v709 = vrot.slane %v700, %v708
    %v710 = vlaneseq
    %v711 = vshrl.u32 %v710, 7
    %v712 = vsub.s32 2, %v711
    %v713 = vrot.slane %v700, %v712
    %v714 = vlaneseq
    %v715 = vshrl.u32 %v714, 7
    %v716 = vsub.s32 3, %v715
    %v717 = vrot.slane %v700, %v716
    %v722 = vmul.f32 %v624, %v705
    %v723 = vmul.f32 %v625, %v709
    %v724 = vmul.f32 %v626, %v713
    %v725 = vmul.f32 %v627, %v717
    %v727 = vlaneseq
    %v728 = vshrl.u32 %v727, 7
    %v729 = vsub.s32 0, %v728
    %v730 = vrot.slane %v670, %v729
    %v731 = vlaneseq
    %v732 = vshrl.u32 %v731, 7
    %v733 = vsub.s32 1, %v732
    %v734 = vrot.slane %v670, %v733
    %v735 = vlaneseq
    %v736 = vshrl.u32 %v735, 7
    %v737 = vsub.s32 2, %v736
    %v738 = vrot.slane %v670, %v737
    %v739 = vlaneseq
    %v740 = vshrl.u32 %v739, 7
    %v741 = vsub.s32 3, %v740
    %v742 = vrot.slane %v670, %v741
    %v747 = vadd.f32 %v722, %v730
    %v748 = vadd.f32 %v723, %v734
    %v749 = vadd.f32 %v724, %v738
    %v750 = vadd.f32 %v725, %v742
    %751 = vst [vmem:[#allocation8] sm:$0xff] %v747
    %752 = vst [vmem:[#allocation8 + $0x8] sm:$0xff] %v748
    %753 = vst [vmem:[#allocation8 + $0x10] sm:$0xff] %v749
    %754 = vst [vmem:[#allocation8 + $0x18] sm:$0xff] %v750
    // Predicated region
    $region26: #{tpu_custom_call.1} parent=1 // pred_check
      _
    $region27: #{tpu_custom_call.1} parent=1 // pred_check_branch
      %756 = sbr.rel (0) target = $region29
    $region28: #{tpu_custom_call.1} parent=1 // pred_region
      %s758 = ssub.s32 512, 512
      %759 = vsyncadd [#allocation4], %s758
      %s761 = sshll.u32 [#allocation8], 4
      %s762 = int_to_ptr.vmem [resolvable:$true] %s761
      %764 = dma.vmem_to_hbm [thread:$0]  %s762, 512, %s3, [#allocation4]
    $region29: #{tpu_custom_call.1} parent=1 // pred_fallthru
      _
    // Predicated region
    $region30: #{tpu_custom_call.1} parent=1 // pred_check
      _
    $region31: #{tpu_custom_call.1} parent=1 // pred_check_branch
      %766 = sbr.rel (0) target = $region33
    $region32: #{tpu_custom_call.1} parent=1 // pred_region
      %767 = dma.done [#allocation4], 512
    $region33: #{tpu_custom_call.1} parent=1 // pred_fallthru
      _
    %768 = vsyncpa [#allocation3], 1
    %769 = vsyncpa [#allocation6], 1
    %770 = vsyncpa [#allocation4], 1

</llo_original>
